<compile_context>
chip_gen: v6e
topology: v6e:2x2x1
jax: 0.10.0
libtpu: 0.0.40
codegen_flags: <defaults>
</compile_context>

<pallas_src>
import numpy as np
import jax
import jax.numpy as jnp
from jax.experimental import pallas as pl
from jax.experimental.pallas import tpu as pltpu

PARAMS = {
    'gain': {'value': 1.0, 'learnable': False},
    'bias': {'value': 0.0, 'learnable': False},
    'tau': {'value': 10.0, 'learnable': False},
    'var': {'value': 0.1, 'learnable': True},
}

_LANE_CANDIDATES = (8192, 4096, 2048, 1024, 512, 256, 128)


def _min_sublane(dtype):
    """Minimum second-minor tile: 8 for 4-byte, 16 for 2-byte, 32 for 1-byte."""
    return max(8, 32 // jnp.dtype(dtype).itemsize)


def _make_ar1_kernel(damp, gain, bias):
    """Bake the (non-learnable) scalars into the kernel as constants."""
    damp = float(damp)
    gain = float(gain)
    bias = float(bias)

    def kernel(input_ref, hidden_ref, out_ref):
        # Python-float scalars are weakly typed: arithmetic stays in the
        # input dtype (no in-register widening copies needed).
        acc = hidden_ref[...] * damp
        if gain == 1.0:
            acc = acc + input_ref[...]
        else:
            acc = acc + gain * input_ref[...]
        if bias != 0.0:
            acc = acc + bias
        out_ref[...] = acc.astype(out_ref.dtype)

    return kernel


def _choose_slab(total, min_sub):
    """Largest lane-dense (rows, lane) factorization of `total`.

    Prefers the widest lane (multiple of 128) that still keeps rows >= the
    dtype's minimum sublane count; falls back to any dividing lane; returns
    None for ragged totals (handled by the jnp fallback)."""
    best = None
    for lane in _LANE_CANDIDATES:
        if total % lane == 0:
            rows = total // lane
            if rows >= min_sub:
                return rows, lane
            if best is None:
                best = (rows, lane)
    return best


def _choose_tile_rows(rows, lane, itemsize, min_sub, block_bytes, min_steps):
    """Row-tile size: ~block_bytes per operand block, multiple of min_sub,
    and at least `min_steps` grid steps when there is enough work."""
    if rows <= min_sub:
        return rows  # full-dim block (legal even if not a multiple of min_sub)
    target = (block_bytes // (lane * itemsize)) // min_sub * min_sub
    target = max(min_sub, target)
    tile = min(target, (rows // min_sub) * min_sub)
    if rows >= min_sub * min_steps:
        cap = max(min_sub, (rows // min_steps) // min_sub * min_sub)
        tile = min(tile, cap)
    return tile


def ar1_calcium_forward(inp, hidden, damp, gain, bias, *,
                        block_bytes=4 << 20,
                        min_pallas_elements=256 * 1024,
                        min_grid_steps=8):
    """Pallas implementation of AR1_Calcium.forward (dtype-preserving)."""
    inp = jnp.asarray(inp)
    hidden = jnp.asarray(hidden)
    assert inp.shape == hidden.shape
    if hidden.dtype != inp.dtype:
        hidden = hidden.astype(inp.dtype)

    orig_shape = inp.shape
    total = int(np.prod(orig_shape)) if orig_shape else 1
    min_sub = _min_sublane(inp.dtype)
    slab = _choose_slab(total, min_sub)

    if total < min_pallas_elements or slab is None:
        # Tiny or ragged problem: let XLA fuse the elementwise expression with
        # its neighbors; pallas launch/pad/slice overhead would dominate.
        out = hidden * damp + gain * inp
        if bias != 0.0:
            out = out + bias
        return out.astype(inp.dtype)

    rows, lane = slab
    x2 = inp.reshape(rows, lane)
    h2 = hidden.reshape(rows, lane)
    itemsize = jnp.dtype(inp.dtype).itemsize
    tile_rows = _choose_tile_rows(rows, lane, itemsize, min_sub,
                                  block_bytes, min_grid_steps)
    grid = (pl.cdiv(rows, tile_rows),)

    out2 = pl.pallas_call(
        _make_ar1_kernel(damp, gain, bias),
        out_shape=jax.ShapeDtypeStruct((rows, lane), inp.dtype),
        grid_spec=pltpu.PrefetchScalarGridSpec(
            num_scalar_prefetch=0,
            grid=grid,
            in_specs=[
                pl.BlockSpec((tile_rows, lane), lambda i: (i, 0)),  # input
                pl.BlockSpec((tile_rows, lane), lambda i: (i, 0)),  # hidden
            ],
            out_specs=pl.BlockSpec((tile_rows, lane), lambda i: (i, 0)),
        ),
        input_output_aliases={1: 0},  # output may reuse the hidden buffer
        compiler_params=pltpu.CompilerParams(
            dimension_semantics=("parallel",),
            vmem_limit_bytes=32 * 1024 * 1024,
        ),
    )(x2, h2)

    return out2.reshape(orig_shape)


class AR1CalciumJAX:
    """Deterministic re-implementation of the PyTorch module's __init__ logic."""

    def __init__(self, parameters=PARAMS):
        self.gain = float(parameters['gain']['value'])
        self.bias = float(parameters['bias']['value'])
        self.logvar = float(np.log(parameters['var']['value']))  # unused in forward
        tau = float(parameters['tau']['value'])
        self.damp = max((tau - 1.0) / tau, 0.0)  # torch.clamp(..., min=0.0)

    def __call__(self, inp, hidden, **kw):
        return ar1_calcium_forward(inp, hidden, self.damp, self.gain, self.bias, **kw)


def _reference(inp, hidden, damp, gain, bias):
    return hidden * damp + gain * inp + bias


if __name__ == "__main__":
    key = jax.random.PRNGKey(0)
    model = AR1CalciumJAX(PARAMS)
    k1, k2, k3, k4, k5, k6, k7, k8 = jax.random.split(key, 8)

    # Case 1: small f32 slab, forced through the Pallas path (single grid step).
    inp = jax.random.normal(k1, (8, 128), dtype=jnp.float32)
    hidden = jax.random.normal(k2, (8, 128), dtype=jnp.float32)
    out = jax.block_until_ready(model(inp, hidden, min_pallas_elements=0))
    ref = _reference(inp, hidden, model.damp, model.gain, model.bias)
    assert out.dtype == inp.dtype
    np.testing.assert_allclose(np.asarray(out), np.asarray(ref), rtol=1e-6, atol=1e-6)

    # Case 2: bf16 inputs, native-dtype streaming, (16,128) min tile.
    inp_b = jax.random.normal(k3, (4, 16, 32), dtype=jnp.bfloat16)
    hid_b = jax.random.normal(k4, (4, 16, 32), dtype=jnp.bfloat16)
    out_b = jax.block_until_ready(model(inp_b, hid_b, min_pallas_elements=0))
    ref_b = _reference(inp_b, hid_b, model.damp, model.gain, model.bias)
    assert out_b.dtype == jnp.bfloat16
    np.testing.assert_allclose(np.asarray(out_b, dtype=np.float32),
                               np.asarray(ref_b, dtype=np.float32),
                               rtol=2e-2, atol=2e-2)

    # Case 3: multi-step parallel grid (aliased output, several row tiles).
    inp_l = jax.random.normal(k5, (256, 1024), dtype=jnp.float32)
    hid_l = jax.random.normal(k6, (256, 1024), dtype=jnp.float32)
    out_l = jax.block_until_ready(
        model(inp_l, hid_l, min_pallas_elements=0, min_grid_steps=4))
    ref_l = _reference(inp_l, hid_l, model.damp, model.gain, model.bias)
    np.testing.assert_allclose(np.asarray(out_l), np.asarray(ref_l), rtol=1e-6, atol=1e-6)

    # Case 4: ragged total + default thresholds -> fused jnp fallback path.
    inp_r = jax.random.normal(k7, (5, 7), dtype=jnp.float32)
    hid_r = jax.random.normal(k8, (5, 7), dtype=jnp.float32)
    out_r = jax.block_until_ready(model(inp_r, hid_r))
    ref_r = _reference(inp_r, hid_r, model.damp, model.gain, model.bias)
    np.testing.assert_allclose(np.asarray(out_r), np.asarray(ref_r), rtol=1e-6, atol=1e-6)

    print("KERNEL_OK")
</pallas_src>

<mosaic_0001>
module attributes {stable_mosaic.version = 11 : i64} {
  func.func @kernel(%arg0: i32, %arg1: memref<8x128xf32, #tpu.memory_space<vmem>>, %arg2: memref<8x128xf32, #tpu.memory_space<vmem>>, %arg3: memref<8x128xf32, #tpu.memory_space<vmem>>) attributes {dimension_semantics = [#tpu.dimension_semantics<parallel>], iteration_bounds = array<i64: 1>, scalar_prefetch = 0 : i64, scratch_operands = 0 : i64, tpu.core_type = #tpu.core_type<tc>, window_params = [{transform_indices = @transform_0, window_bounds = array<i64: 8, 128>}, {transform_indices = @transform_1, window_bounds = array<i64: 8, 128>}, {transform_indices = @transform_2, window_bounds = array<i64: 8, 128>}]} {
    %c0 = arith.constant 0 : index
    %c0_0 = arith.constant 0 : index
    %0 = vector.load %arg2[%c0, %c0_0] : memref<8x128xf32, #tpu.memory_space<vmem>>, vector<8x128xf32>
    %cst = arith.constant 0.899999976 : f32
    %1 = vector.broadcast %cst : f32 to vector<8x128xf32>
    %2 = arith.mulf %0, %1 : vector<8x128xf32>
    %c0_1 = arith.constant 0 : index
    %c0_2 = arith.constant 0 : index
    %3 = vector.load %arg1[%c0_1, %c0_2] : memref<8x128xf32, #tpu.memory_space<vmem>>, vector<8x128xf32>
    %4 = arith.addf %2, %3 : vector<8x128xf32>
    %c0_3 = arith.constant 0 : index
    %c0_4 = arith.constant 0 : index
    %5 = vector.load %arg3[%c0_3, %c0_4] : memref<8x128xf32, #tpu.memory_space<vmem>>, vector<8x128xf32>
    tpu.vector_store %arg3[%c0_3, %c0_4], %4 {strides = array<i32>} : memref<8x128xf32, #tpu.memory_space<vmem>>, vector<8x128xf32>,
    return
  }
  func.func @transform_0(%arg0: i32) -> (i32, i32) {
    %c0_i32 = arith.constant 0 : i32
    %c0_i32_0 = arith.constant 0 : i32
    return %arg0, %c0_i32 : i32, i32
  }
  func.func @transform_1(%arg0: i32) -> (i32, i32) {
    %c0_i32 = arith.constant 0 : i32
    %c0_i32_0 = arith.constant 0 : i32
    return %arg0, %c0_i32 : i32, i32
  }
  func.func @transform_2(%arg0: i32) -> (i32, i32) {
    %c0_i32 = arith.constant 0 : i32
    %c0_i32_0 = arith.constant 0 : i32
    return %arg0, %c0_i32 : i32, i32
  }
}

</mosaic_0001>

<llo_original>
// kernel: tpu_custom_call.1
$region0: #{tpu_custom_call.1}
  #allocation0 [shape = 'u32[]', space=smem, size = 0x4, offset = 0x4, fixed_abs, tag = 'smem constant byte address 0x4 - core index']
  #allocation1 [shape = 'u32[144,128]{1,0:T(1,128)}', space=vmem, size = 0x12000, scoped, tag = 'internal scratch']
  %s0 = inlined_call_operand.vmem [shape: f32[8,128], index: 0, kind: input, shape index: {}]
  %s1 = inlined_call_operand.hbm [shape: f32[8,128], index: 1, kind: input, shape index: {}, may-alias: {1,2}]
  %s2 = inlined_call_operand.hbm [shape: f32[8,128], index: 2, kind: output, shape index: {}, may-alias: {1,2}]
  %s3 = sld [smem:[#allocation0]]
  $region22: #{tpu_custom_call.1} parent=0
    _
  %s5 = ssub.s32 1, %s3
  %s6 = scalar_select 0, %s5, %s3
  $region1: #{tpu_custom_call.1} parent=0
    #allocation2 [shape = 'u8[4096]{0}', space=vmem, size = 0x1000, scoped, tag = 'input window, operand 1, single buffered']
    #allocation3 [shape = 's32[1]{0}', space=sflag, size = 0x4, scoped, tag = 'scoped memory for tpu_custom_call.1']
    #allocation4 [shape = 's32[1]{0}', space=sflag, size = 0x4, scoped, tag = 'scoped memory for tpu_custom_call.1']
    #allocation5 [shape = 'u8[4096]{0}', space=vmem, size = 0x1000, scoped, tag = 'output window, operand 0, single buffered']
    %7 = vsyncpa [#allocation3], 0
    %8 = vsyncpa [#allocation4], 0
    // Predicated region
    $region2: #{tpu_custom_call.1} parent=1 // pred_check
      _
    $region3: #{tpu_custom_call.1} parent=1 // pred_check_branch
      %10 = sbr.rel (0) target = $region5
    $region4: #{tpu_custom_call.1} parent=1 // pred_region
      _
    $region5: #{tpu_custom_call.1} parent=1 // pred_fallthru
      _
    // Predicated region
    $region6: #{tpu_custom_call.1} parent=1 // pred_check
      _
    $region7: #{tpu_custom_call.1} parent=1 // pred_check_branch
      %12 = sbr.rel (0) target = $region9
    $region8: #{tpu_custom_call.1} parent=1 // pred_region
      %s14 = ssub.s32 128, 128
      %15 = vsyncadd [#allocation3], %s14
      %s17 = sshll.u32 [#allocation2], 4
      %s18 = int_to_ptr.vmem [resolvable:$true] %s17
      %20 = dma.hbm_to_vmem [thread:$0]  %s1, 128, %s18, [#allocation3]
    $region9: #{tpu_custom_call.1} parent=1 // pred_fallthru
      _
    // Predicated region
    $region10: #{tpu_custom_call.1} parent=1 // pred_check
      _
    $region11: #{tpu_custom_call.1} parent=1 // pred_check_branch
      %22 = sbr.rel (0) target = $region13
    $region12: #{tpu_custom_call.1} parent=1 // pred_region
      %23 = dma.done [#allocation3], 128
    $region13: #{tpu_custom_call.1} parent=1 // pred_fallthru
      _
    %v24 = vld [vmem:[#allocation2] sm:$0xff]
    %v25 = vmul.f32 %v24, 0.9
    %v26 = vld [vmem:[%s0] sm:$0xff]
    %v27 = vadd.f32 %v25, %v26
    %28 = vst [vmem:[#allocation5] sm:$0xff] %v27
    // Predicated region
    $region14: #{tpu_custom_call.1} parent=1 // pred_check
      _
    $region15: #{tpu_custom_call.1} parent=1 // pred_check_branch
      %30 = sbr.rel (0) target = $region17
    $region16: #{tpu_custom_call.1} parent=1 // pred_region
      %s32 = ssub.s32 128, 128
      %33 = vsyncadd [#allocation4], %s32
      %s35 = sshll.u32 [#allocation5], 4
      %s36 = int_to_ptr.vmem [resolvable:$true] %s35
      %38 = dma.vmem_to_hbm [thread:$0]  %s36, 128, %s2, [#allocation4]
    $region17: #{tpu_custom_call.1} parent=1 // pred_fallthru
      _
    // Predicated region
    $region18: #{tpu_custom_call.1} parent=1 // pred_check
      _
    $region19: #{tpu_custom_call.1} parent=1 // pred_check_branch
      %40 = sbr.rel (0) target = $region21
    $region20: #{tpu_custom_call.1} parent=1 // pred_region
      %41 = dma.done [#allocation4], 128
    $region21: #{tpu_custom_call.1} parent=1 // pred_fallthru
      _
    %42 = vsyncpa [#allocation3], 1
    %43 = vsyncpa [#allocation4], 1

</llo_original>
